<compile_context>
chip_gen: v5e
topology: v5e:2x2
jax: 0.10.0
libtpu: 0.0.40
codegen_flags: <defaults>
</compile_context>

<pallas_src>
import math
import jax
import jax.numpy as jnp
from jax import lax
from jax.experimental import pallas as pl
from jax.experimental.pallas import tpu as pltpu

BITS = 8
BIT_SCALE = 1.0


def _gelu(x):
    c = math.sqrt(2.0 / math.pi)
    return 0.5 * x * (1.0 + jnp.tanh(c * (x + 0.044715 * x * x * x)))


def _pick_hw_tile(HW, max_tile=4096):
    """Largest multiple-of-128 tile dividing HW (or HW itself if small)."""
    if HW <= max_tile:
        return HW
    for t in range(max_tile, 127, -128):
        if HW % t == 0:
            return t
    return HW


def _bit_diffusion_kernel(alpha_ref, sigma_ref, lam_ref,     # SMEM (B,) per-batch scalars
                          img_ref,                           # VMEM (1, C, THW) image in [0,1]
                          noise_ref,                         # VMEM (1, C*BITS, THW) gaussian noise
                          w1a_ref, w1b_ref, b1_ref, wt_ref,  # stand-in model params
                          w2_ref, b2_ref,
                          loss_ref):                         # VMEM (1, 8, 128) partial SSE
    b = pl.program_id(0)
    C = img_ref.shape[1]
    THW = img_ref.shape[2]
    C8 = C * BITS

    # ---- decimal_to_bits: (C, THW) in [0,1] -> (C*8, THW) bits in {-1,+1}, kept as a value ----
    x = img_ref[0]
    xi = jnp.clip((x * 255.0).astype(jnp.int32), 0, 255)     # trunc-toward-zero == torch .int()
    shifts = (BITS - 1) - lax.broadcasted_iota(jnp.int32, (BITS, THW), 0)   # row d -> 7-d
    rows = []
    for c in range(C):                                        # trace-time unrolled sublane broadcasts
        xc = jnp.broadcast_to(xi[c:c + 1, :], (BITS, THW))
        rows.append((xc >> shifts) & 1)
    bits = (jnp.concatenate(rows, axis=0).astype(jnp.float32) * 2.0 - 1.0) * BIT_SCALE

    # ---- q(x_t | x_0) noising with per-batch scalar alpha/sigma ----
    alpha = alpha_ref[b]
    sigma = sigma_ref[b]
    noised = alpha * bits + sigma * noise_ref[0]              # (C8, THW) f32

    # time-conditioned bias, computed once and shared by both model passes
    bias_t = b1_ref[...] + wt_ref[...] * lam_ref[b]           # (HID, 1) f32

    # ---- stand-in denoising model: two 1x1 "convs" as bf16 channel matmuls on the MXU ----
    noised_bf = noised.astype(jnp.bfloat16)
    # shared first-matmul term (w1[:, :C8] @ noised + bias), reused by both passes
    t1 = jnp.dot(w1a_ref[...], noised_bf, preferred_element_type=jnp.float32) + bias_t

    # pass 1: no self-conditioning -> self-cond half of w1 is skipped entirely
    h1 = _gelu(t1)
    self_cond = jnp.dot(w2_ref[...], h1.astype(jnp.bfloat16),
                        preferred_element_type=jnp.float32) + b2_ref[...]

    # pass 2: self-conditioned prediction
    h2 = _gelu(t1 + jnp.dot(w1b_ref[...], self_cond.astype(jnp.bfloat16),
                            preferred_element_type=jnp.float32))
    pred = jnp.dot(w2_ref[...], h2.astype(jnp.bfloat16),
                   preferred_element_type=jnp.float32) + b2_ref[...]

    # ---- partial sum of squared error for this (batch, spatial-tile) block ----
    sse = jnp.sum((pred - bits) ** 2)
    loss_ref[0] = jnp.full((8, 128), sse, dtype=jnp.float32)  # lane-dense unmasked store


def bit_diffusion_forward(img, times, noise, params):
    """img: (B, C, H, W) in [0,1]; times: (B,); noise: (B, C*BITS, H, W)."""
    B, C, H, W = img.shape
    HW = H * W
    C8 = C * BITS
    HID = params["w1"].shape[0]

    thw = _pick_hw_tile(HW)
    n_hw = HW // thw

    img2 = img.reshape(B, C, HW).astype(jnp.float32)
    noise2 = noise.reshape(B, C8, HW).astype(jnp.float32)

    # glue: per-batch scalar cosine noise schedule (alpha_cosine_log_snr) + scalar alpha/sigma
    log_snr = -jnp.log(
        jnp.maximum(jnp.cos((times + 0.008) / 1.008 * (math.pi * 0.5)) ** (-2) - 1.0, 1e-5)
    ).astype(jnp.float32)
    alpha2 = jax.nn.sigmoid(log_snr)
    alpha = jnp.sqrt(alpha2)
    sigma = jnp.sqrt(1.0 - alpha2)

    # weights: split w1, cast MXU operands to bf16 once (wrapper side); biases stay f32
    w1a = params["w1"][:, :C8].astype(jnp.bfloat16)
    w1b = params["w1"][:, C8:].astype(jnp.bfloat16)
    w2 = params["w2"].astype(jnp.bfloat16)
    b1 = params["b1"].astype(jnp.float32)
    wt = params["wt"].astype(jnp.float32)
    b2 = params["b2"].astype(jnp.float32)

    partial = pl.pallas_call(
        _bit_diffusion_kernel,
        out_shape=jax.ShapeDtypeStruct((B * n_hw, 8, 128), jnp.float32),
        grid=(B, n_hw),
        in_specs=[
            pl.BlockSpec(memory_space=pltpu.MemorySpace.SMEM),          # alpha table
            pl.BlockSpec(memory_space=pltpu.MemorySpace.SMEM),          # sigma table
            pl.BlockSpec(memory_space=pltpu.MemorySpace.SMEM),          # log_snr table
            pl.BlockSpec((1, C, thw), lambda b, s: (b, 0, s)),          # img
            pl.BlockSpec((1, C8, thw), lambda b, s: (b, 0, s)),         # noise
            pl.BlockSpec((HID, C8), lambda b, s: (0, 0)),               # w1a (VMEM-resident)
            pl.BlockSpec((HID, C8), lambda b, s: (0, 0)),               # w1b
            pl.BlockSpec((HID, 1), lambda b, s: (0, 0)),                # b1
            pl.BlockSpec((HID, 1), lambda b, s: (0, 0)),                # wt (time cond)
            pl.BlockSpec((C8, HID), lambda b, s: (0, 0)),               # w2
            pl.BlockSpec((C8, 1), lambda b, s: (0, 0)),                 # b2
        ],
        out_specs=pl.BlockSpec((1, 8, 128), lambda b, s: (b * n_hw + s, 0, 0)),
        compiler_params=pltpu.CompilerParams(
            dimension_semantics=("parallel", "parallel"),
            vmem_limit_bytes=32 * 1024 * 1024,
        ),
    )(alpha, sigma, log_snr, img2, noise2, w1a, w1b, b1, wt, w2, b2)

    # mean MSE over every element of the bit tensor (matches F.mse_loss reduction='mean')
    return partial[:, 0, 0].sum() / (B * C8 * HW)


if __name__ == "__main__":
    key = jax.random.PRNGKey(0)
    B, C, H, W = 2, 3, 16, 16
    HID = 32
    C8 = C * BITS
    k = jax.random.split(key, 6)

    img = jax.random.uniform(k[0], (B, C, H, W), jnp.float32)                 # image in [0, 1]
    times = jax.random.uniform(k[1], (B,), jnp.float32, 0.0, 0.999)           # ~ uniform_(0, 0.999)
    noise = jax.random.normal(k[2], (B, C8, H, W), jnp.float32)               # ~ randn_like(bits)

    params = dict(
        w1=0.05 * jax.random.normal(k[3], (HID, 2 * C8), jnp.float32),
        b1=jnp.zeros((HID, 1), jnp.float32),
        wt=0.05 * jax.random.normal(k[4], (HID, 1), jnp.float32),
        w2=0.05 * jax.random.normal(k[5], (C8, HID), jnp.float32),
        b2=jnp.zeros((C8, 1), jnp.float32),
    )

    loss = jax.jit(bit_diffusion_forward)(img, times, noise, params)
    jax.block_until_ready(loss)
    print("KERNEL_OK")
</pallas_src>

<mosaic_0001>
module attributes {stable_mosaic.version = 11 : i64} {
  func.func @_bit_diffusion_kernel(%arg0: i32, %arg1: i32, %arg2: memref<2xf32, #tpu.memory_space<smem>>, %arg3: memref<2xf32, #tpu.memory_space<smem>>, %arg4: memref<2xf32, #tpu.memory_space<smem>>, %arg5: memref<1x3x256xf32, #tpu.memory_space<vmem>>, %arg6: memref<1x24x256xf32, #tpu.memory_space<vmem>>, %arg7: memref<32x24xbf16, #tpu.memory_space<vmem>>, %arg8: memref<32x24xbf16, #tpu.memory_space<vmem>>, %arg9: memref<32x1xf32, #tpu.memory_space<vmem>>, %arg10: memref<32x1xf32, #tpu.memory_space<vmem>>, %arg11: memref<24x32xbf16, #tpu.memory_space<vmem>>, %arg12: memref<24x1xf32, #tpu.memory_space<vmem>>, %arg13: memref<1x8x128xf32, #tpu.memory_space<vmem>>) attributes {dimension_semantics = [#tpu.dimension_semantics<parallel>, #tpu.dimension_semantics<parallel>], iteration_bounds = array<i64: 2, 1>, scalar_prefetch = 0 : i64, scratch_operands = 0 : i64, tpu.core_type = #tpu.core_type<tc>, window_params = [{transform_indices = @transform_0, window_bounds = array<i64: 2>}, {transform_indices = @transform_1, window_bounds = array<i64: 2>}, {transform_indices = @transform_2, window_bounds = array<i64: 2>}, {transform_indices = @transform_3, window_bounds = array<i64: 1, 3, 256>}, {transform_indices = @transform_4, window_bounds = array<i64: 1, 24, 256>}, {pipeline_mode = #tpu.pipeline_mode<synchronous>, transform_indices = @transform_5, window_bounds = array<i64: 32, 24>}, {pipeline_mode = #tpu.pipeline_mode<synchronous>, transform_indices = @transform_6, window_bounds = array<i64: 32, 24>}, {pipeline_mode = #tpu.pipeline_mode<synchronous>, transform_indices = @transform_7, window_bounds = array<i64: 32, 1>}, {pipeline_mode = #tpu.pipeline_mode<synchronous>, transform_indices = @transform_8, window_bounds = array<i64: 32, 1>}, {pipeline_mode = #tpu.pipeline_mode<synchronous>, transform_indices = @transform_9, window_bounds = array<i64: 24, 32>}, {pipeline_mode = #tpu.pipeline_mode<synchronous>, transform_indices = @transform_10, window_bounds = array<i64: 24, 1>}, {transform_indices = @transform_11, window_bounds = array<i64: 1, 8, 128>}]} {
    %c0 = arith.constant 0 : index
    %c0_0 = arith.constant 0 : index
    %c0_1 = arith.constant 0 : index
    %0 = vector.load %arg5[%c0, %c0_0, %c0_1] : memref<1x3x256xf32, #tpu.memory_space<vmem>>, vector<1x3x256xf32>
    %1 = vector.shape_cast %0 : vector<1x3x256xf32> to vector<3x256xf32>
    %cst = arith.constant 2.550000e+02 : f32
    %2 = vector.broadcast %cst : f32 to vector<3x256xf32>
    %3 = arith.mulf %1, %2 : vector<3x256xf32>
    %4 = arith.fptosi %3 : vector<3x256xf32> to vector<3x256xi32>
    %c0_i32 = arith.constant 0 : i32
    %c255_i32 = arith.constant 255 : i32
    %5 = vector.broadcast %c0_i32 : i32 to vector<3x256xi32>
    %6 = arith.maxsi %5, %4 : vector<3x256xi32>
    %7 = vector.broadcast %c255_i32 : i32 to vector<3x256xi32>
    %8 = arith.minsi %7, %6 : vector<3x256xi32>
    %9 = tpu.iota {dimensions = array<i32: 0>} : vector<8x256xi32>
    %c7_i32 = arith.constant 7 : i32
    %10 = vector.broadcast %c7_i32 : i32 to vector<8x256xi32>
    %11 = arith.subi %10, %9 : vector<8x256xi32>
    %12 = vector.extract_strided_slice %8 {offsets = [0, 0], sizes = [1, 256], strides = [1, 1]} : vector<3x256xi32> to vector<1x256xi32>
    %13 = vector.shape_cast %12 : vector<1x256xi32> to vector<1x256xi32>
    %14 = vector.broadcast %13 : vector<1x256xi32> to vector<8x256xi32>
    %15 = arith.shrsi %14, %11 : vector<8x256xi32>
    %c1_i32 = arith.constant 1 : i32
    %16 = vector.broadcast %c1_i32 : i32 to vector<8x256xi32>
    %17 = arith.andi %15, %16 : vector<8x256xi32>
    %18 = vector.extract_strided_slice %8 {offsets = [1, 0], sizes = [1, 256], strides = [1, 1]} : vector<3x256xi32> to vector<1x256xi32>
    %19 = vector.shape_cast %18 : vector<1x256xi32> to vector<1x256xi32>
    %20 = vector.broadcast %19 : vector<1x256xi32> to vector<8x256xi32>
    %21 = arith.shrsi %20, %11 : vector<8x256xi32>
    %c1_i32_2 = arith.constant 1 : i32
    %22 = vector.broadcast %c1_i32_2 : i32 to vector<8x256xi32>
    %23 = arith.andi %21, %22 : vector<8x256xi32>
    %24 = vector.extract_strided_slice %8 {offsets = [2, 0], sizes = [1, 256], strides = [1, 1]} : vector<3x256xi32> to vector<1x256xi32>
    %25 = vector.shape_cast %24 : vector<1x256xi32> to vector<1x256xi32>
    %26 = vector.broadcast %25 : vector<1x256xi32> to vector<8x256xi32>
    %27 = arith.shrsi %26, %11 : vector<8x256xi32>
    %c1_i32_3 = arith.constant 1 : i32
    %28 = vector.broadcast %c1_i32_3 : i32 to vector<8x256xi32>
    %29 = arith.andi %27, %28 : vector<8x256xi32>
    %30 = tpu.concatenate %17, %23, %29 in 0 : vector<8x256xi32>, vector<8x256xi32>, vector<8x256xi32> -> vector<24x256xi32>
    %31 = arith.sitofp %30 : vector<24x256xi32> to vector<24x256xf32>
    %cst_4 = arith.constant 2.000000e+00 : f32
    %32 = vector.broadcast %cst_4 : f32 to vector<24x256xf32>
    %33 = arith.mulf %31, %32 : vector<24x256xf32>
    %cst_5 = arith.constant 1.000000e+00 : f32
    %34 = vector.broadcast %cst_5 : f32 to vector<24x256xf32>
    %35 = arith.subf %33, %34 : vector<24x256xf32>
    %cst_6 = arith.constant 1.000000e+00 : f32
    %36 = vector.broadcast %cst_6 : f32 to vector<24x256xf32>
    %37 = arith.mulf %35, %36 : vector<24x256xf32>
    %38 = arith.index_cast %arg0 : i32 to index
    %39 = memref.load %arg2[%38] : memref<2xf32, #tpu.memory_space<smem>>
    %40 = arith.index_cast %arg0 : i32 to index
    %41 = memref.load %arg3[%40] : memref<2xf32, #tpu.memory_space<smem>>
    %42 = vector.broadcast %39 : f32 to vector<24x256xf32>
    %43 = arith.mulf %42, %37 : vector<24x256xf32>
    %c0_7 = arith.constant 0 : index
    %c0_8 = arith.constant 0 : index
    %c0_9 = arith.constant 0 : index
    %44 = vector.load %arg6[%c0_7, %c0_8, %c0_9] : memref<1x24x256xf32, #tpu.memory_space<vmem>>, vector<1x24x256xf32>
    %45 = vector.shape_cast %44 : vector<1x24x256xf32> to vector<24x256xf32>
    %46 = vector.broadcast %41 : f32 to vector<24x256xf32>
    %47 = arith.mulf %46, %45 : vector<24x256xf32>
    %48 = arith.addf %43, %47 : vector<24x256xf32>
    %c0_10 = arith.constant 0 : index
    %c0_11 = arith.constant 0 : index
    %49 = vector.load %arg9[%c0_10, %c0_11] : memref<32x1xf32, #tpu.memory_space<vmem>>, vector<32x1xf32>
    %c0_12 = arith.constant 0 : index
    %c0_13 = arith.constant 0 : index
    %50 = vector.load %arg10[%c0_12, %c0_13] : memref<32x1xf32, #tpu.memory_space<vmem>>, vector<32x1xf32>
    %51 = arith.index_cast %arg0 : i32 to index
    %52 = memref.load %arg4[%51] : memref<2xf32, #tpu.memory_space<smem>>
    %53 = vector.broadcast %52 : f32 to vector<32x1xf32>
    %54 = arith.mulf %50, %53 : vector<32x1xf32>
    %55 = arith.addf %49, %54 : vector<32x1xf32>
    %56 = arith.truncf %48 : vector<24x256xf32> to vector<24x256xbf16>
    %c0_14 = arith.constant 0 : index
    %c0_15 = arith.constant 0 : index
    %57 = vector.load %arg7[%c0_14, %c0_15] : memref<32x24xbf16, #tpu.memory_space<vmem>>, vector<32x24xbf16>
    %cst_16 = arith.constant dense<0.000000e+00> : vector<32x256xf32>
    %58 = tpu.matmul %57, %56, %cst_16 {dimension_numbers = #tpu.dot_dimension_numbers<[1], [0], [0], [1], [0, 0, 1, 1], [], []>} : vector<32x24xbf16>, vector<24x256xbf16>, vector<32x256xf32> -> vector<32x256xf32>
    %59 = vector.broadcast %55 : vector<32x1xf32> to vector<32x256xf32>
    %60 = arith.addf %58, %59 : vector<32x256xf32>
    %cst_17 = arith.constant 5.000000e-01 : f32
    %61 = vector.broadcast %cst_17 : f32 to vector<32x256xf32>
    %62 = arith.mulf %61, %60 : vector<32x256xf32>
    %cst_18 = arith.constant 4.471500e-02 : f32
    %63 = vector.broadcast %cst_18 : f32 to vector<32x256xf32>
    %64 = arith.mulf %63, %60 : vector<32x256xf32>
    %65 = arith.mulf %64, %60 : vector<32x256xf32>
    %66 = arith.mulf %65, %60 : vector<32x256xf32>
    %67 = arith.addf %60, %66 : vector<32x256xf32>
    %cst_19 = arith.constant 0.797884583 : f32
    %68 = vector.broadcast %cst_19 : f32 to vector<32x256xf32>
    %69 = arith.mulf %68, %67 : vector<32x256xf32>
    %70 = math.tanh %69 : vector<32x256xf32>
    %cst_20 = arith.constant 1.000000e+00 : f32
    %71 = vector.broadcast %cst_20 : f32 to vector<32x256xf32>
    %72 = arith.addf %71, %70 : vector<32x256xf32>
    %73 = arith.mulf %62, %72 : vector<32x256xf32>
    %c0_21 = arith.constant 0 : index
    %c0_22 = arith.constant 0 : index
    %74 = vector.load %arg11[%c0_21, %c0_22] : memref<24x32xbf16, #tpu.memory_space<vmem>>, vector<24x32xbf16>
    %75 = arith.truncf %73 : vector<32x256xf32> to vector<32x256xbf16>
    %cst_23 = arith.constant dense<0.000000e+00> : vector<24x256xf32>
    %76 = tpu.matmul %74, %75, %cst_23 {dimension_numbers = #tpu.dot_dimension_numbers<[1], [0], [0], [1], [0, 0, 1, 1], [], []>} : vector<24x32xbf16>, vector<32x256xbf16>, vector<24x256xf32> -> vector<24x256xf32>
    %c0_24 = arith.constant 0 : index
    %c0_25 = arith.constant 0 : index
    %77 = vector.load %arg12[%c0_24, %c0_25] : memref<24x1xf32, #tpu.memory_space<vmem>>, vector<24x1xf32>
    %78 = vector.broadcast %77 : vector<24x1xf32> to vector<24x256xf32>
    %79 = arith.addf %76, %78 : vector<24x256xf32>
    %c0_26 = arith.constant 0 : index
    %c0_27 = arith.constant 0 : index
    %80 = vector.load %arg8[%c0_26, %c0_27] : memref<32x24xbf16, #tpu.memory_space<vmem>>, vector<32x24xbf16>
    %81 = arith.truncf %79 : vector<24x256xf32> to vector<24x256xbf16>
    %cst_28 = arith.constant dense<0.000000e+00> : vector<32x256xf32>
    %82 = tpu.matmul %80, %81, %cst_28 {dimension_numbers = #tpu.dot_dimension_numbers<[1], [0], [0], [1], [0, 0, 1, 1], [], []>} : vector<32x24xbf16>, vector<24x256xbf16>, vector<32x256xf32> -> vector<32x256xf32>
    %83 = arith.addf %60, %82 : vector<32x256xf32>
    %cst_29 = arith.constant 5.000000e-01 : f32
    %84 = vector.broadcast %cst_29 : f32 to vector<32x256xf32>
    %85 = arith.mulf %84, %83 : vector<32x256xf32>
    %cst_30 = arith.constant 4.471500e-02 : f32
    %86 = vector.broadcast %cst_30 : f32 to vector<32x256xf32>
    %87 = arith.mulf %86, %83 : vector<32x256xf32>
    %88 = arith.mulf %87, %83 : vector<32x256xf32>
    %89 = arith.mulf %88, %83 : vector<32x256xf32>
    %90 = arith.addf %83, %89 : vector<32x256xf32>
    %cst_31 = arith.constant 0.797884583 : f32
    %91 = vector.broadcast %cst_31 : f32 to vector<32x256xf32>
    %92 = arith.mulf %91, %90 : vector<32x256xf32>
    %93 = math.tanh %92 : vector<32x256xf32>
    %cst_32 = arith.constant 1.000000e+00 : f32
    %94 = vector.broadcast %cst_32 : f32 to vector<32x256xf32>
    %95 = arith.addf %94, %93 : vector<32x256xf32>
    %96 = arith.mulf %85, %95 : vector<32x256xf32>
    %c0_33 = arith.constant 0 : index
    %c0_34 = arith.constant 0 : index
    %97 = vector.load %arg11[%c0_33, %c0_34] : memref<24x32xbf16, #tpu.memory_space<vmem>>, vector<24x32xbf16>
    %98 = arith.truncf %96 : vector<32x256xf32> to vector<32x256xbf16>
    %cst_35 = arith.constant dense<0.000000e+00> : vector<24x256xf32>
    %99 = tpu.matmul %97, %98, %cst_35 {dimension_numbers = #tpu.dot_dimension_numbers<[1], [0], [0], [1], [0, 0, 1, 1], [], []>} : vector<24x32xbf16>, vector<32x256xbf16>, vector<24x256xf32> -> vector<24x256xf32>
    %c0_36 = arith.constant 0 : index
    %c0_37 = arith.constant 0 : index
    %100 = vector.load %arg12[%c0_36, %c0_37] : memref<24x1xf32, #tpu.memory_space<vmem>>, vector<24x1xf32>
    %101 = vector.broadcast %100 : vector<24x1xf32> to vector<24x256xf32>
    %102 = arith.addf %99, %101 : vector<24x256xf32>
    %103 = arith.subf %102, %37 : vector<24x256xf32>
    %104 = arith.mulf %103, %103 : vector<24x256xf32>
    %105 = vector.shape_cast %104 : vector<24x256xf32> to vector<1x24x256xf32>
    %cst_38 = arith.constant dense<0.000000e+00> : vector<1xf32>
    %106 = vector.multi_reduction <add>, %105, %cst_38 [1, 2] : vector<1x24x256xf32> to vector<1xf32>
    %107 = vector.shape_cast %106 : vector<1xf32> to vector<1x1x1xf32>
    %108 = vector.extract %107[0, 0, 0] : f32 from vector<1x1x1xf32>
    %109 = vector.broadcast %108 : f32 to vector<8x128xf32>
    %c0_39 = arith.constant 0 : index
    %c0_40 = arith.constant 0 : index
    %c0_41 = arith.constant 0 : index
    %110 = vector.load %arg13[%c0_39, %c0_40, %c0_41] : memref<1x8x128xf32, #tpu.memory_space<vmem>>, vector<1x8x128xf32>
    %111 = vector.shape_cast %110 : vector<1x8x128xf32> to vector<8x128xf32>
    %112 = vector.shape_cast %109 : vector<8x128xf32> to vector<1x8x128xf32>
    tpu.vector_store %arg13[%c0_39, %c0_40, %c0_41], %112 {strides = array<i32>} : memref<1x8x128xf32, #tpu.memory_space<vmem>>, vector<1x8x128xf32>,
    return
  }
  func.func @transform_0(%arg0: i32, %arg1: i32) -> i32 {
    %c0_i32 = arith.constant 0 : i32
    %c0_i32_0 = arith.constant 0 : i32
    return %c0_i32 : i32
  }
  func.func @transform_1(%arg0: i32, %arg1: i32) -> i32 {
    %c0_i32 = arith.constant 0 : i32
    %c0_i32_0 = arith.constant 0 : i32
    return %c0_i32 : i32
  }
  func.func @transform_2(%arg0: i32, %arg1: i32) -> i32 {
    %c0_i32 = arith.constant 0 : i32
    %c0_i32_0 = arith.constant 0 : i32
    return %c0_i32 : i32
  }
  func.func @transform_3(%arg0: i32, %arg1: i32) -> (i32, i32, i32) {
    %c0_i32 = arith.constant 0 : i32
    %c0_i32_0 = arith.constant 0 : i32
    return %arg0, %c0_i32, %arg1 : i32, i32, i32
  }
  func.func @transform_4(%arg0: i32, %arg1: i32) -> (i32, i32, i32) {
    %c0_i32 = arith.constant 0 : i32
    %c0_i32_0 = arith.constant 0 : i32
    return %arg0, %c0_i32, %arg1 : i32, i32, i32
  }
  func.func @transform_5(%arg0: i32, %arg1: i32) -> (i32, i32) {
    %c0_i32 = arith.constant 0 : i32
    %c0_i32_0 = arith.constant 0 : i32
    %c0_i32_1 = arith.constant 0 : i32
    return %c0_i32, %c0_i32_0 : i32, i32
  }
  func.func @transform_6(%arg0: i32, %arg1: i32) -> (i32, i32) {
    %c0_i32 = arith.constant 0 : i32
    %c0_i32_0 = arith.constant 0 : i32
    %c0_i32_1 = arith.constant 0 : i32
    return %c0_i32, %c0_i32_0 : i32, i32
  }
  func.func @transform_7(%arg0: i32, %arg1: i32) -> (i32, i32) {
    %c0_i32 = arith.constant 0 : i32
    %c0_i32_0 = arith.constant 0 : i32
    %c0_i32_1 = arith.constant 0 : i32
    return %c0_i32, %c0_i32_0 : i32, i32
  }
  func.func @transform_8(%arg0: i32, %arg1: i32) -> (i32, i32) {
    %c0_i32 = arith.constant 0 : i32
    %c0_i32_0 = arith.constant 0 : i32
    %c0_i32_1 = arith.constant 0 : i32
    return %c0_i32, %c0_i32_0 : i32, i32
  }
  func.func @transform_9(%arg0: i32, %arg1: i32) -> (i32, i32) {
    %c0_i32 = arith.constant 0 : i32
    %c0_i32_0 = arith.constant 0 : i32
    %c0_i32_1 = arith.constant 0 : i32
    return %c0_i32, %c0_i32_0 : i32, i32
  }
  func.func @transform_10(%arg0: i32, %arg1: i32) -> (i32, i32) {
    %c0_i32 = arith.constant 0 : i32
    %c0_i32_0 = arith.constant 0 : i32
    %c0_i32_1 = arith.constant 0 : i32
    return %c0_i32, %c0_i32_0 : i32, i32
  }
  func.func @transform_11(%arg0: i32, %arg1: i32) -> (i32, i32, i32) {
    %c1_i32 = arith.constant 1 : i32
    %0 = arith.muli %arg0, %c1_i32 : i32
    %1 = arith.addi %0, %arg1 : i32
    %c0_i32 = arith.constant 0 : i32
    %c0_i32_0 = arith.constant 0 : i32
    %c0_i32_1 = arith.constant 0 : i32
    return %1, %c0_i32, %c0_i32_0 : i32, i32, i32
  }
}

</mosaic_0001>

<llo_original>
// kernel: bit_diffusion_forward.1
$region0: #{bit_diffusion_forward.1}
  #allocation0 [shape = 'u32[]', space=smem, size = 0x4, offset = 0x4, fixed_abs, tag = 'smem constant byte address 0x4 - core index']
  #allocation1 [shape = 'u32[72,128]{1,0:T(1,128)}', space=vmem, size = 0x9000, scoped, tag = 'internal scratch']
  %s0 = inlined_call_operand.vmem [shape: f32[2], index: 0, kind: input, shape index: {}]
  %s1 = inlined_call_operand.vmem [shape: f32[2], index: 1, kind: input, shape index: {}]
  %s2 = inlined_call_operand.vmem [shape: f32[2], index: 2, kind: input, shape index: {}]
  %s3 = inlined_call_operand.vmem [shape: f32[2,3,256], index: 3, kind: input, shape index: {}]
  %s4 = inlined_call_operand.vmem [shape: f32[2,24,256], index: 4, kind: input, shape index: {}]
  %s5 = inlined_call_operand.vmem [shape: bf16[32,24], index: 5, kind: input, shape index: {}]
  %s6 = inlined_call_operand.vmem [shape: bf16[32,24], index: 6, kind: input, shape index: {}]
  %s7 = inlined_call_operand.vmem [shape: f32[32,1], index: 7, kind: input, shape index: {}]
  %s8 = inlined_call_operand.vmem [shape: f32[32,1], index: 8, kind: input, shape index: {}]
  %s9 = inlined_call_operand.vmem [shape: bf16[24,32], index: 9, kind: input, shape index: {}]
  %s10 = inlined_call_operand.vmem [shape: f32[24,1], index: 10, kind: input, shape index: {}]
  %s11 = inlined_call_operand.vmem [shape: f32[2,8,128], index: 11, kind: output, shape index: {}]
  %s12 = sld [smem:[#allocation0]]
  $region89: #{bit_diffusion_forward.1} parent=0
    _
  %s14 = ssub.s32 1, %s12
  %s15 = scalar_select 0, %s14, %s12
  $region1: #{bit_diffusion_forward.1} parent=0
    #allocation2 [shape = 'u8[512]{0}', space=smem, size = 0x200, scoped, tag = 'input window, operand 0, single buffered']
    #allocation3 [shape = 's32[2]{0}', space=sflag, size = 0x8, scoped, tag = 'scoped memory for bit_diffusion_forward.1']
    #allocation4 [shape = 'u8[512]{0}', space=smem, size = 0x200, scoped, tag = 'input window, operand 1, single buffered']
    #allocation5 [shape = 's32[1]{0}', space=sflag, size = 0x4, scoped, tag = 'scoped memory for bit_diffusion_forward.1']
    #allocation6 [shape = 'u8[512]{0}', space=smem, size = 0x200, scoped, tag = 'input window, operand 2, single buffered']
    %16 = vsyncpa [#allocation3], 0
    %17 = vsyncpa [#allocation5], 0
    loop: start=0, step=1, limit=4
    $region2: #{bit_diffusion_forward.1} parent=1 // loop_pre_header
      _
    $region3: #{bit_diffusion_forward.1} parent=1 // loop_header
      %s19 = sphi 0, %s23
      %p20 = scmp.ge.s32.totalorder %s19, 4
      %s26 = sphi 0, %s38
      %s27 = sphi 0, %s34
      %s28 = sphi 0, %s26
      %s29 = sphi 0, %s27
      %s30 = sphi 0, %s28
      %s31 = sphi 0, %s29
      %s39 = sphi 0, %s39
      %s41 = sphi 0, %s39
      %s42 = sphi 0, %s41
      %s56 = sphi 0, %s42
      %s60 = sphi 0, %s60
      %s62 = sphi 0, %s60
      %s63 = sphi 0, %s62
      %s77 = sphi 0, %s63
      %s81 = sphi 0, %s81
      %s83 = sphi 0, %s81
      %s84 = sphi 0, %s83
      %s98 = sphi 0, %s84
      %s106 = sphi 0, %s108
      %s109 = sphi 0, %s106
      %s110 = sphi 0, %s109
      %s126 = sphi 0, %s110
      %s134 = sphi 0, %s136
      %s137 = sphi 0, %s134
      %s138 = sphi 0, %s137
      %s154 = sphi 0, %s138
      %s158 = sphi 0, %s158
      %s160 = sphi 0, %s158
      %s161 = sphi 0, %s160
      %s175 = sphi 0, %s161
      %s179 = sphi 0, %s179
      %s181 = sphi 0, %s179
      %s182 = sphi 0, %s181
      %s196 = sphi 0, %s182
      %s200 = sphi 0, %s200
      %s202 = sphi 0, %s200
      %s203 = sphi 0, %s202
      %s217 = sphi 0, %s203
      %s221 = sphi 0, %s221
      %s223 = sphi 0, %s221
      %s224 = sphi 0, %s223
      %s238 = sphi 0, %s224
      %s242 = sphi 0, %s242
      %s244 = sphi 0, %s242
      %s245 = sphi 0, %s244
      %s259 = sphi 0, %s245
      %s263 = sphi 0, %s263
      %s265 = sphi 0, %s263
      %s266 = sphi 0, %s265
      %s280 = sphi 0, %s266
      %s288 = sphi 0, %s290
      %s291 = sphi 0, %s288
      %s292 = sphi 0, %s291
      %s308 = sphi 0, %s292
    $region4: #{bit_diffusion_forward.1} parent=1 // loop_header_branch
      %22 = sbr.rel (%p20) target = $region8
    $region5: #{bit_diffusion_forward.1} parent=1 // loop_body
      %s24 = ssub.s32 %s19, 1
      %s25 = ssub.s32 %s19, 2
      %s32 = sadd.s32 1, %s27
      %p33 = scmp.ge.s32.totalorder %s32, 1
      %s34 = scalar_select %p33, 0, %s32
      %s35 = sadd.s32 1, %s26
      %s36 = scalar_select %p33, %s35, %s26
      %p37 = scmp.ge.s32.totalorder %s36, 2
      %s38 = scalar_select %p37, 0, %s36
      %s40 = sadd.s32 %s39, 1
      %p43 = scmp.eq.s32.totalorder %s19, 1
      %p44 = scmp.ne.s32.totalorder %s39, %s41
      %p45 = scmp.eq.s32.totalorder %s19, 0
      %p46 = por %p44, %p45
      %p47 = scmp.ne.s32.totalorder %s39, %s41
      %p48 = scmp.eq.s32.totalorder %s24, 1
      %p49 = por %p47, %p48
      %p50 = scmp.ne.s32.totalorder %s41, %s42
      %p51 = scmp.eq.s32.totalorder %s24, 0
      %p52 = por %p50, %p51
      %p53 = scmp.ne.s32.totalorder %s41, %s42
      %p54 = scmp.eq.s32.totalorder %s25, 1
      %p55 = por %p53, %p54
      %p57 = scmp.ne.s32.totalorder %s42, %s56
      %p58 = scmp.eq.s32.totalorder %s25, 0
      %p59 = por %p57, %p58
      %s61 = sadd.s32 %s60, 1
      %p64 = scmp.eq.s32.totalorder %s19, 1
      %p65 = scmp.ne.s32.totalorder %s60, %s62
      %p66 = scmp.eq.s32.totalorder %s19, 0
      %p67 = por %p65, %p66
      %p68 = scmp.ne.s32.totalorder %s60, %s62
      %p69 = scmp.eq.s32.totalorder %s24, 1
      %p70 = por %p68, %p69
      %p71 = scmp.ne.s32.totalorder %s62, %s63
      %p72 = scmp.eq.s32.totalorder %s24, 0
      %p73 = por %p71, %p72
      %p74 = scmp.ne.s32.totalorder %s62, %s63
      %p75 = scmp.eq.s32.totalorder %s25, 1
      %p76 = por %p74, %p75
      %p78 = scmp.ne.s32.totalorder %s63, %s77
      %p79 = scmp.eq.s32.totalorder %s25, 0
      %p80 = por %p78, %p79
      %s82 = sadd.s32 %s81, 1
      %p85 = scmp.eq.s32.totalorder %s19, 1
      %p86 = scmp.ne.s32.totalorder %s81, %s83
      %p87 = scmp.eq.s32.totalorder %s19, 0
      %p88 = por %p86, %p87
      %p89 = scmp.ne.s32.totalorder %s81, %s83
      %p90 = scmp.eq.s32.totalorder %s24, 1
      %p91 = por %p89, %p90
      %p92 = scmp.ne.s32.totalorder %s83, %s84
      %p93 = scmp.eq.s32.totalorder %s24, 0
      %p94 = por %p92, %p93
      %p95 = scmp.ne.s32.totalorder %s83, %s84
      %p96 = scmp.eq.s32.totalorder %s25, 1
      %p97 = por %p95, %p96
      %p99 = scmp.ne.s32.totalorder %s84, %s98
      %p100 = scmp.eq.s32.totalorder %s25, 0
      %p101 = por %p99, %p100
      %s102 = ssub.s32 %s26, %s38
      %s103 = ssub.s32 %s27, %s34
      %s104 = sor.u32 %s102, %s103
      %p105 = scmp.eq.s32.totalorder %s104, 0
      %s107 = sadd.s32 %s106, 1
      %s108 = scalar_select %p105, %s106, %s107
      %p111 = pneg %p105
      %p112 = scmp.eq.s32.totalorder %s19, 1
      %p113 = por %p111, %p112
      %p114 = scmp.ne.s32.totalorder %s106, %s109
      %p115 = scmp.eq.s32.totalorder %s19, 0
      %p116 = por %p114, %p115
      %p117 = scmp.ne.s32.totalorder %s106, %s109
      %p118 = scmp.eq.s32.totalorder %s24, 1
      %p119 = por %p117, %p118
      %p120 = scmp.ne.s32.totalorder %s109, %s110
      %p121 = scmp.eq.s32.totalorder %s24, 0
      %p122 = por %p120, %p121
      %p123 = scmp.ne.s32.totalorder %s109, %s110
      %p124 = scmp.eq.s32.totalorder %s25, 1
      %p125 = por %p123, %p124
      %p127 = scmp.ne.s32.totalorder %s110, %s126
      %p128 = scmp.eq.s32.totalorder %s25, 0
      %p129 = por %p127, %p128
      %s130 = ssub.s32 %s26, %s38
      %s131 = ssub.s32 %s27, %s34
      %s132 = sor.u32 %s130, %s131
      %p133 = scmp.eq.s32.totalorder %s132, 0
      %s135 = sadd.s32 %s134, 1
      %s136 = scalar_select %p133, %s134, %s135
      %p139 = pneg %p133
      %p140 = scmp.eq.s32.totalorder %s19, 1
      %p141 = por %p139, %p140
      %p142 = scmp.ne.s32.totalorder %s134, %s137
      %p143 = scmp.eq.s32.totalorder %s19, 0
      %p144 = por %p142, %p143
      %p145 = scmp.ne.s32.totalorder %s134, %s137
      %p146 = scmp.eq.s32.totalorder %s24, 1
      %p147 = por %p145, %p146
      %p148 = scmp.ne.s32.totalorder %s137, %s138
      %p149 = scmp.eq.s32.totalorder %s24, 0
      %p150 = por %p148, %p149
      %p151 = scmp.ne.s32.totalorder %s137, %s138
      %p152 = scmp.eq.s32.totalorder %s25, 1
      %p153 = por %p151, %p152
      %p155 = scmp.ne.s32.totalorder %s138, %s154
      %p156 = scmp.eq.s32.totalorder %s25, 0
      %p157 = por %p155, %p156
      %s159 = sadd.s32 %s158, 1
      %p162 = scmp.eq.s32.totalorder %s19, 1
      %p163 = scmp.ne.s32.totalorder %s158, %s160
      %p164 = scmp.eq.s32.totalorder %s19, 0
      %p165 = por %p163, %p164
      %p166 = scmp.ne.s32.totalorder %s158, %s160
      %p167 = scmp.eq.s32.totalorder %s24, 1
      %p168 = por %p166, %p167
      %p169 = scmp.ne.s32.totalorder %s160, %s161
      %p170 = scmp.eq.s32.totalorder %s24, 0
      %p171 = por %p169, %p170
      %p172 = scmp.ne.s32.totalorder %s160, %s161
      %p173 = scmp.eq.s32.totalorder %s25, 1
      %p174 = por %p172, %p173
      %p176 = scmp.ne.s32.totalorder %s161, %s175
      %p177 = scmp.eq.s32.totalorder %s25, 0
      %p178 = por %p176, %p177
      %s180 = sadd.s32 %s179, 1
      %p183 = scmp.eq.s32.totalorder %s19, 1
      %p184 = scmp.ne.s32.totalorder %s179, %s181
      %p185 = scmp.eq.s32.totalorder %s19, 0
      %p186 = por %p184, %p185
      %p187 = scmp.ne.s32.totalorder %s179, %s181
      %p188 = scmp.eq.s32.totalorder %s24, 1
      %p189 = por %p187, %p188
      %p190 = scmp.ne.s32.totalorder %s181, %s182
      %p191 = scmp.eq.s32.totalorder %s24, 0
      %p192 = por %p190, %p191
      %p193 = scmp.ne.s32.totalorder %s181, %s182
      %p194 = scmp.eq.s32.totalorder %s25, 1
      %p195 = por %p193, %p194
      %p197 = scmp.ne.s32.totalorder %s182, %s196
      %p198 = scmp.eq.s32.totalorder %s25, 0
      %p199 = por %p197, %p198
      %s201 = sadd.s32 %s200, 1
      %p204 = scmp.eq.s32.totalorder %s19, 1
      %p205 = scmp.ne.s32.totalorder %s200, %s202
      %p206 = scmp.eq.s32.totalorder %s19, 0
      %p207 = por %p205, %p206
      %p208 = scmp.ne.s32.totalorder %s200, %s202
      %p209 = scmp.eq.s32.totalorder %s24, 1
      %p210 = por %p208, %p209
      %p211 = scmp.ne.s32.totalorder %s202, %s203
      %p212 = scmp.eq.s32.totalorder %s24, 0
      %p213 = por %p211, %p212
      %p214 = scmp.ne.s32.totalorder %s202, %s203
      %p215 = scmp.eq.s32.totalorder %s25, 1
      %p216 = por %p214, %p215
      %p218 = scmp.ne.s32.totalorder %s203, %s217
      %p219 = scmp.eq.s32.totalorder %s25, 0
      %p220 = por %p218, %p219
      %s222 = sadd.s32 %s221, 1
      %p225 = scmp.eq.s32.totalorder %s19, 1
      %p226 = scmp.ne.s32.totalorder %s221, %s223
      %p227 = scmp.eq.s32.totalorder %s19, 0
      %p228 = por %p226, %p227
      %p229 = scmp.ne.s32.totalorder %s221, %s223
      %p230 = scmp.eq.s32.totalorder %s24, 1
      %p231 = por %p229, %p230
      %p232 = scmp.ne.s32.totalorder %s223, %s224
      %p233 = scmp.eq.s32.totalorder %s24, 0
      %p234 = por %p232, %p233
      %p235 = scmp.ne.s32.totalorder %s223, %s224
      %p236 = scmp.eq.s32.totalorder %s25, 1
      %p237 = por %p235, %p236
      %p239 = scmp.ne.s32.totalorder %s224, %s238
      %p240 = scmp.eq.s32.totalorder %s25, 0
      %p241 = por %p239, %p240
      %s243 = sadd.s32 %s242, 1
      %p246 = scmp.eq.s32.totalorder %s19, 1
      %p247 = scmp.ne.s32.totalorder %s242, %s244
      %p248 = scmp.eq.s32.totalorder %s19, 0
      %p249 = por %p247, %p248
      %p250 = scmp.ne.s32.totalorder %s242, %s244
      %p251 = scmp.eq.s32.totalorder %s24, 1
      %p252 = por %p250, %p251
      %p253 = scmp.ne.s32.totalorder %s244, %s245
      %p254 = scmp.eq.s32.totalorder %s24, 0
      %p255 = por %p253, %p254
      %p256 = scmp.ne.s32.totalorder %s244, %s245
      %p257 = scmp.eq.s32.totalorder %s25, 1
      %p258 = por %p256, %p257
      %p260 = scmp.ne.s32.totalorder %s245, %s259
      %p261 = scmp.eq.s32.totalorder %s25, 0
      %p262 = por %p260, %p261
      %s264 = sadd.s32 %s263, 1
      %p267 = scmp.eq.s32.totalorder %s19, 1
      %p268 = scmp.ne.s32.totalorder %s263, %s265
      %p269 = scmp.eq.s32.totalorder %s19, 0
      %p270 = por %p268, %p269
      %p271 = scmp.ne.s32.totalorder %s263, %s265
      %p272 = scmp.eq.s32.totalorder %s24, 1
      %p273 = por %p271, %p272
      %p274 = scmp.ne.s32.totalorder %s265, %s266
      %p275 = scmp.eq.s32.totalorder %s24, 0
      %p276 = por %p274, %p275
      %p277 = scmp.ne.s32.totalorder %s265, %s266
      %p278 = scmp.eq.s32.totalorder %s25, 1
      %p279 = por %p277, %p278
      %p281 = scmp.ne.s32.totalorder %s266, %s280
      %p282 = scmp.eq.s32.totalorder %s25, 0
      %p283 = por %p281, %p282
      %s284 = sadd.s32 %s26, %s27
      %s285 = sadd.s32 %s38, %s34
      %s286 = ssub.s32 %s284, %s285
      %p287 = scmp.eq.s32.totalorder %s286, 0
      %s289 = sadd.s32 %s288, 1
      %s290 = scalar_select %p287, %s288, %s289
      %p293 = pneg %p287
      %p294 = scmp.eq.s32.totalorder %s19, 1
      %p295 = por %p293, %p294
      %p296 = scmp.ne.s32.totalorder %s288, %s291
      %p297 = scmp.eq.s32.totalorder %s19, 0
      %p298 = por %p296, %p297
      %p299 = scmp.ne.s32.totalorder %s288, %s291
      %p300 = scmp.eq.s32.totalorder %s24, 1
      %p301 = por %p299, %p300
      %p302 = scmp.ne.s32.totalorder %s291, %s292
      %p303 = scmp.eq.s32.totalorder %s24, 0
      %p304 = por %p302, %p303
      %p305 = scmp.ne.s32.totalorder %s291, %s292
      %p306 = scmp.eq.s32.totalorder %s25, 1
      %p307 = por %p305, %p306
      %p309 = scmp.ne.s32.totalorder %s292, %s308
      %p310 = scmp.eq.s32.totalorder %s25, 0
      %p311 = por %p309, %p310
      %p312 = scmp.le.s32.totalorder 1, %s19
      %p313 = scmp.lt.s32.totalorder %s19, 3
      %p314 = pnand %p312, %p313
      %p315 = pneg %p314
      // Predicated region
      $region9: #{bit_diffusion_forward.1} parent=5 // pred_check
        _
      $region10: #{bit_diffusion_forward.1} parent=5 // pred_check_branch
        %317 = sbr.rel (%p314) target = $region12
      $region11: #{bit_diffusion_forward.1} parent=5 // pred_region
        %s318 = ssub.s32 %s19, 1
        // Predicated region
        $region13: #{bit_diffusion_forward.1} parent=11 // pred_check
          %p319 = pneg %p52
        $region14: #{bit_diffusion_forward.1} parent=11 // pred_check_branch
          %321 = sbr.rel (%p319) target = $region16
        $region15: #{bit_diffusion_forward.1} parent=11 // pred_region
          %323 = vsyncadd [#allocation3], 0
          %s325 = sshll.u32 %s0, 4
          %s326 = int_to_ptr.vmem [resolvable:$true] %s325
          %328 = dma.vmem_to_smem %s326, 16, [#allocation2], [#allocation3]
        $region16: #{bit_diffusion_forward.1} parent=11 // pred_fallthru
          _
        // Predicated region
        $region17: #{bit_diffusion_forward.1} parent=11 // pred_check
          %p329 = pneg %p73
        $region18: #{bit_diffusion_forward.1} parent=11 // pred_check_branch
          %331 = sbr.rel (%p329) target = $region20
        $region19: #{bit_diffusion_forward.1} parent=11 // pred_region
          %333 = vsyncadd [#allocation5], 0
          %s335 = sshll.u32 %s1, 4
          %s336 = int_to_ptr.vmem [resolvable:$true] %s335
          %338 = dma.vmem_to_smem %s336, 16, [#allocation4], [#allocation5]
        $region20: #{bit_diffusion_forward.1} parent=11 // pred_fallthru
          _
        // Predicated region
        $region21: #{bit_diffusion_forward.1} parent=11 // pred_check
          %p339 = pneg %p94
        $region22: #{bit_diffusion_forward.1} parent=11 // pred_check_branch
          %341 = sbr.rel (%p339) target = $region24
        $region23: #{bit_diffusion_forward.1} parent=11 // pred_region
          %343 = vsyncadd [#allocation5], 0
          %s345 = sshll.u32 %s2, 4
          %s346 = int_to_ptr.vmem [resolvable:$true] %s345
          %348 = dma.vmem_to_smem %s346, 16, [#allocation6], [#allocation5]
        $region24: #{bit_diffusion_forward.1} parent=11 // pred_fallthru
          _
        // Predicated region
        $region25: #{bit_diffusion_forward.1} parent=11 // pred_check
          %p349 = pneg %p171
        $region26: #{bit_diffusion_forward.1} parent=11 // pred_check_branch
          %351 = sbr.rel (%p349) target = $region28
        $region27: #{bit_diffusion_forward.1} parent=11 // pred_region
          _
        $region28: #{bit_diffusion_forward.1} parent=11 // pred_fallthru
          _
        // Predicated region
        $region29: #{bit_diffusion_forward.1} parent=11 // pred_check
          %p352 = pneg %p192
        $region30: #{bit_diffusion_forward.1} parent=11 // pred_check_branch
          %354 = sbr.rel (%p352) target = $region32
        $region31: #{bit_diffusion_forward.1} parent=11 // pred_region
          _
        $region32: #{bit_diffusion_forward.1} parent=11 // pred_fallthru
          _
        // Predicated region
        $region33: #{bit_diffusion_forward.1} parent=11 // pred_check
          %p355 = pneg %p213
        $region34: #{bit_diffusion_forward.1} parent=11 // pred_check_branch
          %357 = sbr.rel (%p355) target = $region36
        $region35: #{bit_diffusion_forward.1} parent=11 // pred_region
          _
        $region36: #{bit_diffusion_forward.1} parent=11 // pred_fallthru
          _
        // Predicated region
        $region37: #{bit_diffusion_forward.1} parent=11 // pred_check
          %p358 = pneg %p234
        $region38: #{bit_diffusion_forward.1} parent=11 // pred_check_branch
          %360 = sbr.rel (%p358) target = $region40
        $region39: #{bit_diffusion_forward.1} parent=11 // pred_region
          _
        $region40: #{bit_diffusion_forward.1} parent=11 // pred_fallthru
          _
        // Predicated region
        $region41: #{bit_diffusion_forward.1} parent=11 // pred_check
          %p361 = pneg %p255
        $region42: #{bit_diffusion_forward.1} parent=11 // pred_check_branch
          %363 = sbr.rel (%p361) target = $region44
        $region43: #{bit_diffusion_forward.1} parent=11 // pred_region
          _
        $region44: #{bit_diffusion_forward.1} parent=11 // pred_fallthru
          _
        // Predicated region
        $region45: #{bit_diffusion_forward.1} parent=11 // pred_check
          %p364 = pneg %p276
        $region46: #{bit_diffusion_forward.1} parent=11 // pred_check_branch
          %366 = sbr.rel (%p364) target = $region48
        $region47: #{bit_diffusion_forward.1} parent=11 // pred_region
          _
        $region48: #{bit_diffusion_forward.1} parent=11 // pred_fallthru
          _
      $region12: #{bit_diffusion_forward.1} parent=5 // pred_fallthru
        _
      %p367 = scmp.lt.s32.totalorder %s19, 2
      // Predicated region
      $region49: #{bit_diffusion_forward.1} parent=5 // pred_check
        %p368 = pneg %p367
      $region50: #{bit_diffusion_forward.1} parent=5 // pred_check_branch
        %370 = sbr.rel (%p368) target = $region52
      $region51: #{bit_diffusion_forward.1} parent=5 // pred_region
        // Predicated region
        $region53: #{bit_diffusion_forward.1} parent=51 // pred_check
          %p371 = pneg %p116
        $region54: #{bit_diffusion_forward.1} parent=51 // pred_check_branch
          %373 = sbr.rel (%p371) target = $region56
        $region55: #{bit_diffusion_forward.1} parent=51 // pred_region
          %s374 = smul.u32 2, %s27
          %p375 = scmp.lt.s32.totalorder %s26, 1
          %s376 = scalar_select %p375, %s26, 1
          %p377 = scmp.lt.s32.totalorder %s374, 1
          %s378 = scalar_select %p377, %s374, 1
          %s379 = smul.addr %s376, 2
          %s380 = sadd.s32 %s378, %s379
          %s381 = smul.addr %s380, 4
          %s382 = scalar_lea.vmem %s3, %s381
          %s383 = smul.u32 2, %s27
        $region56: #{bit_diffusion_forward.1} parent=51 // pred_fallthru
          _
        // Predicated region
        $region57: #{bit_diffusion_forward.1} parent=51 // pred_check
          %p384 = pneg %p144
        $region58: #{bit_diffusion_forward.1} parent=51 // pred_check_branch
          %386 = sbr.rel (%p384) target = $region60
        $region59: #{bit_diffusion_forward.1} parent=51 // pred_region
          %s387 = smul.u32 2, %s27
          %p388 = scmp.lt.s32.totalorder %s26, 1
          %s389 = scalar_select %p388, %s26, 1
          %p390 = scmp.lt.s32.totalorder %s387, 1
          %s391 = scalar_select %p390, %s387, 1
          %s392 = smul.addr %s389, 6
          %s393 = sadd.s32 %s391, %s392
          %s394 = smul.addr %s393, 8
          %s395 = scalar_lea.vmem %s4, %s394
          %s396 = smul.u32 2, %s27
        $region60: #{bit_diffusion_forward.1} parent=51 // pred_fallthru
          _
      $region52: #{bit_diffusion_forward.1} parent=5 // pred_fallthru
        _
      %p397 = scmp.le.s32.totalorder 1, %s19
      %p398 = scmp.lt.s32.totalorder %s19, 3
      %p399 = pnand %p397, %p398
      %p400 = pneg %p399
      // Predicated region
      $region61: #{bit_diffusion_forward.1} parent=5 // pred_check
        _
      $region62: #{bit_diffusion_forward.1} parent=5 // pred_check_branch
        %402 = sbr.rel (%p399) target = $region64
      $region63: #{bit_diffusion_forward.1} parent=5 // pred_region
        %s403 = ssub.s32 %s19, 1
        // Predicated region
        $region65: #{bit_diffusion_forward.1} parent=63 // pred_check
          %p404 = pneg %p52
        $region66: #{bit_diffusion_forward.1} parent=63 // pred_check_branch
          %406 = sbr.rel (%p404) target = $region68
        $region67: #{bit_diffusion_forward.1} parent=63 // pred_region
          %408 = dma.done [#allocation3], 16
        $region68: #{bit_diffusion_forward.1} parent=63 // pred_fallthru
          _
        // Predicated region
        $region69: #{bit_diffusion_forward.1} parent=63 // pred_check
          %p409 = pneg %p73
        $region70: #{bit_diffusion_forward.1} parent=63 // pred_check_branch
          %411 = sbr.rel (%p409) target = $region72
        $region71: #{bit_diffusion_forward.1} parent=63 // pred_region
          %413 = dma.done [#allocation5], 16
        $region72: #{bit_diffusion_forward.1} parent=63 // pred_fallthru
          _
        // Predicated region
        $region73: #{bit_diffusion_forward.1} parent=63 // pred_check
          %p414 = pneg %p94
        $region74: #{bit_diffusion_forward.1} parent=63 // pred_check_branch
          %416 = sbr.rel (%p414) target = $region76
        $region75: #{bit_diffusion_forward.1} parent=63 // pred_region
          %418 = dma.done [#allocation5], 16
        $region76: #{bit_diffusion_forward.1} parent=63 // pred_fallthru
          _
        %419 = sfence
        %p420 = pneg %p52
        %p421 = pneg %p49
        %p422 = pneg %p73
        %p423 = pneg %p70
        %p424 = pneg %p94
        %p425 = pneg %p91
        %s426 = smul.u32 2, %s29
        %p427 = scmp.lt.s32.totalorder %s28, 1
        %s428 = scalar_select %p427, %s28, 1
        %p429 = scmp.lt.s32.totalorder %s426, 1
        %s430 = scalar_select %p429, %s426, 1
        %s431 = smul.addr %s428, 2
        %s432 = sadd.s32 %s430, %s431
        %s433 = smul.addr %s432, 4
        %s434 = scalar_lea.vmem %s3, %s433
        %p435 = pneg %p122
        %p436 = pneg %p119
        %s437 = smul.u32 2, %s29
        %p438 = scmp.lt.s32.totalorder %s28, 1
        %s439 = scalar_select %p438, %s28, 1
        %p440 = scmp.lt.s32.totalorder %s437, 1
        %s441 = scalar_select %p440, %s437, 1
        %s442 = smul.addr %s439, 6
        %s443 = sadd.s32 %s441, %s442
        %s444 = smul.addr %s443, 8
        %s445 = scalar_lea.vmem %s4, %s444
        %p446 = pneg %p150
        %p447 = pneg %p147
        %p448 = pneg %p171
        %p449 = pneg %p168
        %p450 = pneg %p192
        %p451 = pneg %p189
        %p452 = pneg %p213
        %p453 = pneg %p210
        %p454 = pneg %p234
        %p455 = pneg %p231
        %p456 = pneg %p255
        %p457 = pneg %p252
        %p458 = pneg %p276
        %p459 = pneg %p273
        %p460 = pneg %p304
        %p461 = pneg %p301
        %s462 = sadd.s32 %s28, %s29
        %p463 = scmp.lt.s32.totalorder %s462, 1
        %s464 = scalar_select %p463, %s462, 1
        %s465 = smul.addr %s464, 8
        %s466 = scalar_lea.vmem %s11, %s465
        %s467 = smul.u32 2, %s29
        %p468 = scmp.lt.s32.totalorder %s28, 1
        %s469 = scalar_select %p468, %s28, 1
        %p470 = scmp.lt.s32.totalorder %s467, 1
        %s471 = scalar_select %p470, %s467, 1
        %s472 = smul.addr %s469, 2
        %s473 = sadd.s32 %s471, %s472
        %s474 = smul.addr %s473, 4
        %s475 = scalar_lea.vmem %s3, %s474
        %s476 = smul.u32 2, %s29
        %s477 = smul.u32 2, %s29
        %p478 = scmp.lt.s32.totalorder %s28, 1
        %s479 = scalar_select %p478, %s28, 1
        %p480 = scmp.lt.s32.totalorder %s477, 1
        %s481 = scalar_select %p480, %s477, 1
        %s482 = smul.addr %s479, 6
        %s483 = sadd.s32 %s481, %s482
        %s484 = smul.addr %s483, 8
        %s485 = scalar_lea.vmem %s4, %s484
        %s486 = smul.u32 2, %s29
        %s487 = sadd.s32 %s28, %s29
        %p488 = scmp.lt.s32.totalorder %s487, 1
        %s489 = scalar_select %p488, %s487, 1
        %s490 = smul.addr %s489, 8
        %s491 = scalar_lea.vmem %s11, %s490
        %s492 = sadd.s32 %s28, %s29
        %v494 = vld [vmem:[%s475] sm:$0x77]
        %v495 = vmul.f32 %v494, 255.0
        %v496 = vcvt.f32.s32.to.zero.pseudo %v495
        %vm497 = vcmp.gt.s32.totalorder %v496, 0
        %v498 = vsel %vm497, %v496, 0
        %vm499 = vcmp.lt.s32.totalorder %v498, 255
        %v500 = vsel %vm499, %v498, 255
        %v501 = vlaneseq
        %v502 = vshrl.u32 %v501, 7
        %v503 = vsub.s32 7, %v502
        %v504 = vperm.slane %v500, 0
        %v505 = vperm.slane %v500, 4
        %v506 = vperm.slane %v504, 0
        %v507 = vperm.slane %v505, 0
        %v508 = vshra.s32 %v506, %v503
        %v509 = vshra.s32 %v507, %v503
        %v510 = vand.u32 %v508, 1
        %v511 = vand.u32 %v509, 1
        %v512 = vperm.slane %v500, 1
        %v513 = vperm.slane %v500, 5
        %v514 = vperm.slane %v512, 1
        %v515 = vperm.slane %v513, 1
        %v516 = vshra.s32 %v514, %v503
        %v517 = vshra.s32 %v515, %v503
        %v518 = vand.u32 %v516, 1
        %v519 = vand.u32 %v517, 1
        %v520 = vperm.slane %v500, 2
        %v521 = vperm.slane %v500, 6
        %v522 = vperm.slane %v520, 2
        %v523 = vperm.slane %v521, 2
        %v524 = vshra.s32 %v522, %v503
        %v525 = vshra.s32 %v523, %v503
        %v526 = vand.u32 %v524, 1
        %v527 = vand.u32 %v525, 1
        %v528 = vcvt.s32.f32 %v510
        %v529 = vcvt.s32.f32 %v511
        %v530 = vcvt.s32.f32 %v518
        %v531 = vcvt.s32.f32 %v519
        %v532 = vcvt.s32.f32 %v526
        %v533 = vcvt.s32.f32 %v527
        %v534 = vmul.f32 %v528, 2.0
        %v535 = vmul.f32 %v529, 2.0
        %v536 = vmul.f32 %v530, 2.0
        %v537 = vmul.f32 %v531, 2.0
        %v538 = vmul.f32 %v532, 2.0
        %v539 = vmul.f32 %v533, 2.0
        %v540 = vsub.f32 %v534, 1.0
        %v541 = vsub.f32 %v535, 1.0
        %v542 = vsub.f32 %v536, 1.0
        %v543 = vsub.f32 %v537, 1.0
        %v544 = vsub.f32 %v538, 1.0
        %v545 = vsub.f32 %v539, 1.0
        %s546 = sld [smem:[#allocation2 + %s28]]
        %s547 = sld [smem:[#allocation4 + %s28]]
        %v548 = vstv %s546
        %v549 = vmul.f32 %v548, %v540
        %v550 = vmul.f32 %v548, %v541
        %v551 = vmul.f32 %v548, %v542
        %v552 = vmul.f32 %v548, %v543
        %v553 = vmul.f32 %v548, %v544
        %v554 = vmul.f32 %v548, %v545
        %v555 = vld [vmem:[%s485] sm:$0xff]
        %v556 = vld [vmem:[%s485 + $0x8] sm:$0xff]
        %v557 = vld [vmem:[%s485 + $0x10] sm:$0xff]
        %v558 = vld [vmem:[%s485 + $0x18] sm:$0xff]
        %v559 = vld [vmem:[%s485 + $0x20] sm:$0xff]
        %v560 = vld [vmem:[%s485 + $0x28] sm:$0xff]
        %v561 = vstv %s547
        %v562 = vmul.f32 %v561, %v555
        %v563 = vmul.f32 %v561, %v556
        %v564 = vmul.f32 %v561, %v557
        %v565 = vmul.f32 %v561, %v558
        %v566 = vmul.f32 %v561, %v559
        %v567 = vmul.f32 %v561, %v560
        %v568 = vadd.f32 %v549, %v562
        %v569 = vadd.f32 %v550, %v563
        %v570 = vadd.f32 %v551, %v564
        %v571 = vadd.f32 %v552, %v565
        %v572 = vadd.f32 %v553, %v566
        %v573 = vadd.f32 %v554, %v567
        %v574 = vld [vmem:[%s7] sm:$0xff]
        %v575 = vld [vmem:[%s7 + $0x8] sm:$0xff]
        %v576 = vld [vmem:[%s7 + $0x10] sm:$0xff]
        %v577 = vld [vmem:[%s7 + $0x18] sm:$0xff]
        %v578 = vld [vmem:[%s8] sm:$0xff]
        %v579 = vld [vmem:[%s8 + $0x8] sm:$0xff]
        %v580 = vld [vmem:[%s8 + $0x10] sm:$0xff]
        %v581 = vld [vmem:[%s8 + $0x18] sm:$0xff]
        %s582 = sld [smem:[#allocation6 + %s28]]
        %v583 = vstv %s582
        %v584 = vmul.f32 %v578, %v583
        %v585 = vmul.f32 %v579, %v583
        %v586 = vmul.f32 %v580, %v583
        %v587 = vmul.f32 %v581, %v583
        %v588 = vadd.f32 %v574, %v584
        %v589 = vadd.f32 %v575, %v585
        %v590 = vadd.f32 %v576, %v586
        %v591 = vadd.f32 %v577, %v587
        %v592 = vpack.c.bf16 %v570, %v568
        %v593 = vpack.c.bf16 %v571, %v569
        %v594 = vpack.c.bf16 %v572, %v572
        %v595 = vpack.c.bf16 %v573, %v573
        %v596 = vld [vmem:[%s5] sm:$0xf]
        %v597 = vld [vmem:[%s5 + $0x4] sm:$0xf]
        %v598 = vld [vmem:[%s5 + $0x8] sm:$0xf]
        %v599 = vld [vmem:[%s5 + $0xc] sm:$0xf]
        %601 = vset.pattern.permute.xlu0 0
        %602 = vperm.xlu0 %601, %v588
        %v603 = vpop.permute.xlu0 %602
        %606 = vset.pattern.permute.xlu0 0
        %607 = vperm.xlu0 %606, %v589
        %v608 = vpop.permute.xlu0 %607
        %611 = vset.pattern.permute.xlu0 0
        %612 = vperm.xlu0 %611, %v590
        %v613 = vpop.permute.xlu0 %612
        %616 = vset.pattern.permute.xlu0 0
        %617 = vperm.xlu0 %616, %v591
        %v618 = vpop.permute.xlu0 %617
        %v624 = vunpack.c.l.b16 %v596
        %v625 = vunpack.c.l.b16 %v597
        %v626 = vunpack.c.l.b16 %v598
        %v627 = vunpack.c.l.b16 %v599
        %v628 = vpack.c.b16 %v625, %v624
        %v629 = vpack.c.b16 %v627, %v626
        %vm630 = vcmask 195584
        %v632 = vsel %vm630, %v628, 0
        %v635 = vsel %vm630, %v629, 0
        %vm637 = vcmask 1043456
        %v639 = vsel %vm637, %v594, 0
        %v642 = vsel %vm637, %v595, 0
        %644 = vmatpush.bf16.msra.mxu0 0
        %645 = vmatpush.bf16.msra.mxu0 0
        %646 = vmatpush.bf16.msra.mxu0 0
        %647 = vmatpush.bf16.msra.mxu0 0
        %648 = vmatpush.bf16.msra.mxu0 0
        %649 = vmatpush.bf16.msra.mxu0 0
        %650 = vmatpush.bf16.msra.mxu0 %v639
        %651 = vmatpush.bf16.msra.mxu0 %v592
        %652 = vmatmul.bf16.gmra.mxu0 %v632
        %v653 = vpop.f32.mrf.mxu0
        %v654 = vadd.f32 %v603, %v653
        %v655 = vpop.f32.mrf.mxu0
        %v656 = vadd.f32 %v608, %v655
        %657 = vmatmul.bf16.gmra.mxu0 %v635
        %v658 = vpop.f32.mrf.mxu0
        %v659 = vadd.f32 %v613, %v658
        %v660 = vpop.f32.mrf.mxu0
        %v661 = vadd.f32 %v618, %v660
        %662 = vdwg.mxu0
        %663 = vmatpush.bf16.msra.mxu0 0
        %664 = vmatpush.bf16.msra.mxu0 0
        %665 = vmatpush.bf16.msra.mxu0 0
        %666 = vmatpush.bf16.msra.mxu0 0
        %667 = vmatpush.bf16.msra.mxu0 0
        %668 = vmatpush.bf16.msra.mxu0 0
        %669 = vmatpush.bf16.msra.mxu0 %v642
        %670 = vmatpush.bf16.msra.mxu0 %v593
        %671 = vmatmul.bf16.gmra.mxu0 %v632
        %v672 = vpop.f32.mrf.mxu0
        %v673 = vadd.f32 %v603, %v672
        %v674 = vpop.f32.mrf.mxu0
        %v675 = vadd.f32 %v608, %v674
        %676 = vmatmul.bf16.gmra.mxu0 %v635
        %v677 = vpop.f32.mrf.mxu0
        %v678 = vadd.f32 %v613, %v677
        %v679 = vpop.f32.mrf.mxu0
        %v680 = vadd.f32 %v618, %v679
        %681 = vdwg.mxu0
        %v682 = vmul.f32 %v654, 0.5
        %v683 = vmul.f32 %v673, 0.5
        %v684 = vmul.f32 %v656, 0.5
        %v685 = vmul.f32 %v675, 0.5
        %v686 = vmul.f32 %v659, 0.5
        %v687 = vmul.f32 %v678, 0.5
        %v688 = vmul.f32 %v661, 0.5
        %v689 = vmul.f32 %v680, 0.5
        %v690 = vmul.f32 %v654, 0.044715
        %v691 = vmul.f32 %v673, 0.044715
        %v692 = vmul.f32 %v656, 0.044715
        %v693 = vmul.f32 %v675, 0.044715
        %v694 = vmul.f32 %v659, 0.044715
        %v695 = vmul.f32 %v678, 0.044715
        %v696 = vmul.f32 %v661, 0.044715
        %v697 = vmul.f32 %v680, 0.044715
        %v698 = vmul.f32 %v690, %v654
        %v699 = vmul.f32 %v691, %v673
        %v700 = vmul.f32 %v692, %v656
        %v701 = vmul.f32 %v693, %v675
        %v702 = vmul.f32 %v694, %v659
        %v703 = vmul.f32 %v695, %v678
        %v704 = vmul.f32 %v696, %v661
        %v705 = vmul.f32 %v697, %v680
        %v706 = vmul.f32 %v698, %v654
        %v707 = vmul.f32 %v699, %v673
        %v708 = vmul.f32 %v700, %v656
        %v709 = vmul.f32 %v701, %v675
        %v710 = vmul.f32 %v702, %v659
        %v711 = vmul.f32 %v703, %v678
        %v712 = vmul.f32 %v704, %v661
        %v713 = vmul.f32 %v705, %v680
        %v714 = vadd.f32 %v654, %v706
        %v715 = vadd.f32 %v673, %v707
        %v716 = vadd.f32 %v656, %v708
        %v717 = vadd.f32 %v675, %v709
        %v718 = vadd.f32 %v659, %v710
        %v719 = vadd.f32 %v678, %v711
        %v720 = vadd.f32 %v661, %v712
        %v721 = vadd.f32 %v680, %v713
        %v722 = vmul.f32 %v714, 0.7978846
        %v723 = vmul.f32 %v715, 0.7978846
        %v724 = vmul.f32 %v716, 0.7978846
        %v725 = vmul.f32 %v717, 0.7978846
        %v726 = vmul.f32 %v718, 0.7978846
        %v727 = vmul.f32 %v719, 0.7978846
        %v728 = vmul.f32 %v720, 0.7978846
        %v729 = vmul.f32 %v721, 0.7978846
        %v730 = vtanh.pop %v722
        %v731 = vtanh.pop %v723
        %v732 = vtanh.pop %v724
        %v733 = vtanh.pop %v725
        %v734 = vtanh.pop %v726
        %v735 = vtanh.pop %v727
        %v736 = vtanh.pop %v728
        %v737 = vtanh.pop %v729
        %v738 = vadd.f32 %v730, 1.0
        %v739 = vadd.f32 %v731, 1.0
        %v740 = vadd.f32 %v732, 1.0
        %v741 = vadd.f32 %v733, 1.0
        %v742 = vadd.f32 %v734, 1.0
        %v743 = vadd.f32 %v735, 1.0
        %v744 = vadd.f32 %v736, 1.0
        %v745 = vadd.f32 %v737, 1.0
        %v746 = vmul.f32 %v682, %v738
        %v747 = vmul.f32 %v683, %v739
        %v748 = vmul.f32 %v684, %v740
        %v749 = vmul.f32 %v685, %v741
        %v750 = vmul.f32 %v686, %v742
        %v751 = vmul.f32 %v687, %v743
        %v752 = vmul.f32 %v688, %v744
        %v753 = vmul.f32 %v689, %v745
        %v754 = vld [vmem:[%s9] sm:$0xf]
        %v755 = vld [vmem:[%s9 + $0x4] sm:$0xf]
        %v756 = vld [vmem:[%s9 + $0x8] sm:$0xf]
        %v757 = vpack.c.bf16 %v748, %v746
        %v758 = vpack.c.bf16 %v749, %v747
        %v759 = vpack.c.bf16 %v752, %v750
        %v760 = vpack.c.bf16 %v753, %v751
        %v761 = vld [vmem:[%s10] sm:$0xff]
        %v762 = vld [vmem:[%s10 + $0x8] sm:$0xff]
        %v763 = vld [vmem:[%s10 + $0x10] sm:$0xff]
        %765 = vset.pattern.permute.xlu0 0
        %766 = vperm.xlu0 %765, %v761
        %v767 = vpop.permute.xlu0 %766
        %770 = vset.pattern.permute.xlu0 0
        %771 = vperm.xlu0 %770, %v762
        %v772 = vpop.permute.xlu0 %771
        %775 = vset.pattern.permute.xlu0 0
        %776 = vperm.xlu0 %775, %v763
        %v777 = vpop.permute.xlu0 %776
        %v782 = vunpack.c.l.b16 %v754
        %v783 = vunpack.c.l.b16 %v755
        %v784 = vunpack.c.l.b16 %v756
        %v785 = vpack.c.b16 %v783, %v782
        %v786 = vpack.c.b16 %v784, %v784
        %vm787 = vcmask 261120
        %v789 = vsel %vm787, %v785, 0
        %v792 = vsel %vm787, %v786, 0
        %794 = vmatpush.bf16.msra.mxu0 0
        %795 = vmatpush.bf16.msra.mxu0 0
        %796 = vmatpush.bf16.msra.mxu0 0
        %797 = vmatpush.bf16.msra.mxu0 0
        %798 = vmatpush.bf16.msra.mxu0 0
        %799 = vmatpush.bf16.msra.mxu0 0
        %800 = vmatpush.bf16.msra.mxu0 %v759
        %801 = vmatpush.bf16.msra.mxu0 %v757
        %802 = vmatmul.bf16.gmra.mxu0 %v789
        %v803 = vpop.f32.mrf.mxu0
        %v804 = vadd.f32 %v767, %v803
        %v805 = vpop.f32.mrf.mxu0
        %v806 = vadd.f32 %v772, %v805
        %807 = vmatmul.bf16.gmra.mxu0 %v792
        %v808 = vpop.f32.mrf.mxu0
        %v809 = vadd.f32 %v777, %v808
        %v810 = vpop.f32.mrf.mxu0
        %811 = vdwg.mxu0
        %812 = vmatpush.bf16.msra.mxu0 0
        %813 = vmatpush.bf16.msra.mxu0 0
        %814 = vmatpush.bf16.msra.mxu0 0
        %815 = vmatpush.bf16.msra.mxu0 0
        %816 = vmatpush.bf16.msra.mxu0 0
        %817 = vmatpush.bf16.msra.mxu0 0
        %818 = vmatpush.bf16.msra.mxu0 %v760
        %819 = vmatpush.bf16.msra.mxu0 %v758
        %820 = vmatmul.bf16.gmra.mxu0 %v789
        %v821 = vpop.f32.mrf.mxu0
        %v822 = vadd.f32 %v767, %v821
        %v823 = vpop.f32.mrf.mxu0
        %v824 = vadd.f32 %v772, %v823
        %825 = vmatmul.bf16.gmra.mxu0 %v792
        %v826 = vpop.f32.mrf.mxu0
        %v827 = vadd.f32 %v777, %v826
        %v828 = vpop.f32.mrf.mxu0
        %829 = vdwg.mxu0
        %v830 = vld [vmem:[%s6] sm:$0xf]
        %v831 = vld [vmem:[%s6 + $0x4] sm:$0xf]
        %v832 = vld [vmem:[%s6 + $0x8] sm:$0xf]
        %v833 = vld [vmem:[%s6 + $0xc] sm:$0xf]
        %v834 = vpack.c.bf16 %v806, %v804
        %v835 = vpack.c.bf16 %v824, %v822
        %v836 = vpack.c.bf16 %v809, %v809
        %v837 = vpack.c.bf16 %v827, %v827
        %v842 = vunpack.c.l.b16 %v830
        %v843 = vunpack.c.l.b16 %v831
        %v844 = vunpack.c.l.b16 %v832
        %v845 = vunpack.c.l.b16 %v833
        %v846 = vpack.c.b16 %v843, %v842
        %v847 = vpack.c.b16 %v845, %v844
        %v849 = vsel %vm630, %v846, 0
        %v852 = vsel %vm630, %v847, 0
        %v855 = vsel %vm637, %v836, 0
        %v858 = vsel %vm637, %v837, 0
        %860 = vmatpush.bf16.msra.mxu0 0
        %861 = vmatpush.bf16.msra.mxu0 0
        %862 = vmatpush.bf16.msra.mxu0 0
        %863 = vmatpush.bf16.msra.mxu0 0
        %864 = vmatpush.bf16.msra.mxu0 0
        %865 = vmatpush.bf16.msra.mxu0 0
        %866 = vmatpush.bf16.msra.mxu0 %v855
        %867 = vmatpush.bf16.msra.mxu0 %v834
        %868 = vmatmul.bf16.gmra.mxu0 %v849
        %v869 = vpop.f32.mrf.mxu0
        %v870 = vadd.f32 0.0, %v869
        %v871 = vpop.f32.mrf.mxu0
        %v872 = vadd.f32 0.0, %v871
        %873 = vmatmul.bf16.gmra.mxu0 %v852
        %v874 = vpop.f32.mrf.mxu0
        %v875 = vadd.f32 0.0, %v874
        %v876 = vpop.f32.mrf.mxu0
        %v877 = vadd.f32 0.0, %v876
        %878 = vdwg.mxu0
        %879 = vmatpush.bf16.msra.mxu0 0
        %880 = vmatpush.bf16.msra.mxu0 0
        %881 = vmatpush.bf16.msra.mxu0 0
        %882 = vmatpush.bf16.msra.mxu0 0
        %883 = vmatpush.bf16.msra.mxu0 0
        %884 = vmatpush.bf16.msra.mxu0 0
        %885 = vmatpush.bf16.msra.mxu0 %v858
        %886 = vmatpush.bf16.msra.mxu0 %v835
        %887 = vmatmul.bf16.gmra.mxu0 %v849
        %v888 = vpop.f32.mrf.mxu0
        %v889 = vadd.f32 0.0, %v888
        %v890 = vpop.f32.mrf.mxu0
        %v891 = vadd.f32 0.0, %v890
        %892 = vmatmul.bf16.gmra.mxu0 %v852
        %v893 = vpop.f32.mrf.mxu0
        %v894 = vadd.f32 0.0, %v893
        %v895 = vpop.f32.mrf.mxu0
        %v896 = vadd.f32 0.0, %v895
        %897 = vdwg.mxu0
        %v898 = vadd.f32 %v654, %v870
        %v899 = vadd.f32 %v673, %v889
        %v900 = vadd.f32 %v656, %v872
        %v901 = vadd.f32 %v675, %v891
        %v902 = vadd.f32 %v659, %v875
        %v903 = vadd.f32 %v678, %v894
        %v904 = vadd.f32 %v661, %v877
        %v905 = vadd.f32 %v680, %v896
        %v906 = vmul.f32 %v898, 0.5
        %v907 = vmul.f32 %v899, 0.5
        %v908 = vmul.f32 %v900, 0.5
        %v909 = vmul.f32 %v901, 0.5
        %v910 = vmul.f32 %v902, 0.5
        %v911 = vmul.f32 %v903, 0.5
        %v912 = vmul.f32 %v904, 0.5
        %v913 = vmul.f32 %v905, 0.5
        %v914 = vmul.f32 %v898, 0.044715
        %v915 = vmul.f32 %v899, 0.044715
        %v916 = vmul.f32 %v900, 0.044715
        %v917 = vmul.f32 %v901, 0.044715
        %v918 = vmul.f32 %v902, 0.044715
        %v919 = vmul.f32 %v903, 0.044715
        %v920 = vmul.f32 %v904, 0.044715
        %v921 = vmul.f32 %v905, 0.044715
        %v922 = vmul.f32 %v914, %v898
        %v923 = vmul.f32 %v915, %v899
        %v924 = vmul.f32 %v916, %v900
        %v925 = vmul.f32 %v917, %v901
        %v926 = vmul.f32 %v918, %v902
        %v927 = vmul.f32 %v919, %v903
        %v928 = vmul.f32 %v920, %v904
        %v929 = vmul.f32 %v921, %v905
        %v930 = vmul.f32 %v922, %v898
        %v931 = vmul.f32 %v923, %v899
        %v932 = vmul.f32 %v924, %v900
        %v933 = vmul.f32 %v925, %v901
        %v934 = vmul.f32 %v926, %v902
        %v935 = vmul.f32 %v927, %v903
        %v936 = vmul.f32 %v928, %v904
        %v937 = vmul.f32 %v929, %v905
        %v938 = vadd.f32 %v898, %v930
        %v939 = vadd.f32 %v899, %v931
        %v940 = vadd.f32 %v900, %v932
        %v941 = vadd.f32 %v901, %v933
        %v942 = vadd.f32 %v902, %v934
        %v943 = vadd.f32 %v903, %v935
        %v944 = vadd.f32 %v904, %v936
        %v945 = vadd.f32 %v905, %v937
        %v946 = vmul.f32 %v938, 0.7978846
        %v947 = vmul.f32 %v939, 0.7978846
        %v948 = vmul.f32 %v940, 0.7978846
        %v949 = vmul.f32 %v941, 0.7978846
        %v950 = vmul.f32 %v942, 0.7978846
        %v951 = vmul.f32 %v943, 0.7978846
        %v952 = vmul.f32 %v944, 0.7978846
        %v953 = vmul.f32 %v945, 0.7978846
        %v954 = vtanh.pop %v946
        %v955 = vtanh.pop %v947
        %v956 = vtanh.pop %v948
        %v957 = vtanh.pop %v949
        %v958 = vtanh.pop %v950
        %v959 = vtanh.pop %v951
        %v960 = vtanh.pop %v952
        %v961 = vtanh.pop %v953
        %v962 = vadd.f32 %v954, 1.0
        %v963 = vadd.f32 %v955, 1.0
        %v964 = vadd.f32 %v956, 1.0
        %v965 = vadd.f32 %v957, 1.0
        %v966 = vadd.f32 %v958, 1.0
        %v967 = vadd.f32 %v959, 1.0
        %v968 = vadd.f32 %v960, 1.0
        %v969 = vadd.f32 %v961, 1.0
        %v970 = vmul.f32 %v906, %v962
        %v971 = vmul.f32 %v907, %v963
        %v972 = vmul.f32 %v908, %v964
        %v973 = vmul.f32 %v909, %v965
        %v974 = vmul.f32 %v910, %v966
        %v975 = vmul.f32 %v911, %v967
        %v976 = vmul.f32 %v912, %v968
        %v977 = vmul.f32 %v913, %v969
        %v978 = vpack.c.bf16 %v972, %v970
        %v979 = vpack.c.bf16 %v973, %v971
        %v980 = vpack.c.bf16 %v976, %v974
        %v981 = vpack.c.bf16 %v977, %v975
        %982 = vmatpush.bf16.msra.mxu0 0
        %983 = vmatpush.bf16.msra.mxu0 0
        %984 = vmatpush.bf16.msra.mxu0 0
        %985 = vmatpush.bf16.msra.mxu0 0
        %986 = vmatpush.bf16.msra.mxu0 0
        %987 = vmatpush.bf16.msra.mxu0 0
        %988 = vmatpush.bf16.msra.mxu0 %v980
        %989 = vmatpush.bf16.msra.mxu0 %v978
        %990 = vmatmul.bf16.gmra.mxu0 %v789
        %v991 = vpop.f32.mrf.mxu0
        %v992 = vadd.f32 %v767, %v991
        %v993 = vpop.f32.mrf.mxu0
        %v994 = vadd.f32 %v772, %v993
        %995 = vmatmul.bf16.gmra.mxu0 %v792
        %v996 = vpop.f32.mrf.mxu0
        %v997 = vadd.f32 %v777, %v996
        %v998 = vpop.f32.mrf.mxu0
        %999 = vdwg.mxu0
        %1000 = vmatpush.bf16.msra.mxu0 0
        %1001 = vmatpush.bf16.msra.mxu0 0
        %1002 = vmatpush.bf16.msra.mxu0 0
        %1003 = vmatpush.bf16.msra.mxu0 0
        %1004 = vmatpush.bf16.msra.mxu0 0
        %1005 = vmatpush.bf16.msra.mxu0 0
        %1006 = vmatpush.bf16.msra.mxu0 %v981
        %1007 = vmatpush.bf16.msra.mxu0 %v979
        %1008 = vmatmul.bf16.gmra.mxu0 %v789
        %v1009 = vpop.f32.mrf.mxu0
        %v1010 = vadd.f32 %v767, %v1009
        %v1011 = vpop.f32.mrf.mxu0
        %v1012 = vadd.f32 %v772, %v1011
        %1013 = vmatmul.bf16.gmra.mxu0 %v792
        %v1014 = vpop.f32.mrf.mxu0
        %v1015 = vadd.f32 %v777, %v1014
        %v1016 = vpop.f32.mrf.mxu0
        %1017 = vdwg.mxu0
        %v1018 = vsub.f32 %v992, %v540
        %v1019 = vsub.f32 %v1010, %v541
        %v1020 = vsub.f32 %v994, %v542
        %v1021 = vsub.f32 %v1012, %v543
        %v1022 = vsub.f32 %v997, %v544
        %v1023 = vsub.f32 %v1015, %v545
        %v1024 = vmul.f32 %v1018, %v1018
        %v1025 = vmul.f32 %v1019, %v1019
        %v1026 = vmul.f32 %v1020, %v1020
        %v1027 = vmul.f32 %v1021, %v1021
        %v1028 = vmul.f32 %v1022, %v1022
        %v1029 = vmul.f32 %v1023, %v1023
        %v1030 = vadd.f32 %v1024, %v1025
        %v1031 = vadd.f32 %v1030, %v1026
        %v1032 = vadd.f32 %v1031, %v1027
        %v1033 = vadd.f32 %v1032, %v1028
        %v1034 = vadd.f32 %v1033, %v1029
        %1035 = vadd.xlane.f32.xlu0 %v1034
        %v1036 = vpop.xlane.xlu0 %1035
        %v1037 = vrot.slane %v1036, 4
        %v1038 = vadd.f32 %v1036, %v1037
        %v1039 = vrot.slane %v1038, 2
        %v1040 = vadd.f32 %v1038, %v1039
        %v1041 = vrot.slane %v1040, 1
        %v1042 = vadd.f32 %v1040, %v1041
        %s1043 = vtos %v1042
        %v1044 = vstv %s1043
        %1045 = vst [vmem:[%s491] sm:$0xff] %v1044
        %s1046 = sadd.s32 %s28, %s29
        %p1047 = scmp.lt.s32.totalorder %s1046, 1
        %s1048 = scalar_select %p1047, %s1046, 1
        %s1049 = smul.addr %s1048, 8
        %s1050 = scalar_lea.vmem %s11, %s1049
        // Predicated region
        $region77: #{bit_diffusion_forward.1} parent=63 // pred_check
          %p1051 = pneg %p301
        $region78: #{bit_diffusion_forward.1} parent=63 // pred_check_branch
          %1053 = sbr.rel (%p1051) target = $region80
        $region79: #{bit_diffusion_forward.1} parent=63 // pred_region
          %s1054 = sadd.s32 %s28, %s29
        $region80: #{bit_diffusion_forward.1} parent=63 // pred_fallthru
          _
      $region64: #{bit_diffusion_forward.1} parent=5 // pred_fallthru
        _
      %p1055 = scmp.le.s32.totalorder 2, %s19
      // Predicated region
      $region81: #{bit_diffusion_forward.1} parent=5 // pred_check
        %p1056 = pneg %p1055
      $region82: #{bit_diffusion_forward.1} parent=5 // pred_check_branch
        %1058 = sbr.rel (%p1056) target = $region84
      $region83: #{bit_diffusion_forward.1} parent=5 // pred_region
        %s1059 = ssub.s32 %s19, 2
        // Predicated region
        $region85: #{bit_diffusion_forward.1} parent=83 // pred_check
          %p1060 = pneg %p307
        $region86: #{bit_diffusion_forward.1} parent=83 // pred_check_branch
          %1062 = sbr.rel (%p1060) target = $region88
        $region87: #{bit_diffusion_forward.1} parent=83 // pred_region
          %s1063 = sadd.s32 %s30, %s31
          %p1064 = scmp.lt.s32.totalorder %s1063, 1
          %s1065 = scalar_select %p1064, %s1063, 1
          %s1066 = smul.addr %s1065, 8
          %s1067 = scalar_lea.vmem %s11, %s1066
        $region88: #{bit_diffusion_forward.1} parent=83 // pred_fallthru
          _
      $region84: #{bit_diffusion_forward.1} parent=5 // pred_fallthru
        _
    $region6: #{bit_diffusion_forward.1} parent=1 // loop_footer
      %s23 = sadd.s32 1, %s19
    $region7: #{bit_diffusion_forward.1} parent=1 // loop_footer_branch
      %18 = sbr.rel target = $region3
    $region8: #{bit_diffusion_forward.1} parent=1 // loop_exit
      _
    %1068 = vsyncpa [#allocation3], 1
    %s1069 = scalar_lea.sflag [#allocation3], 1
    %1070 = vsyncpa %s1069, 1
    %1071 = vsyncpa [#allocation5], 1

</llo_original>
